<compile_context>
chip_gen: v7x
topology: tpu7x:2x2x1
jax: 0.10.0
libtpu: 0.0.40
codegen_flags: <defaults>
</compile_context>

<pallas_src>
import functools

import jax
import jax.numpy as jnp
from jax.experimental import pallas as pl
from jax.experimental.pallas import tpu as pltpu


def _round_up(x: int, m: int) -> int:
    return ((x + m - 1) // m) * m


def _cdiv(a: int, b: int) -> int:
    return -(-a // b)


def _vmem_budget_bytes() -> int:
    """~75% of physical VMEM; conservative 64 MiB (v7x per-TC) fallback."""
    cap = 64 * 1024 * 1024
    try:
        info = pltpu.get_tpu_info()
        c = getattr(info, "vmem_capacity_bytes", None)
        if c is not None and int(c) > 0:
            cap = int(c)
    except Exception:
        pass
    budget = int(cap * 3 // 4)
    budget = max(32 * 1024 * 1024, min(budget, 100 * 1024 * 1024))
    return budget


def _vmem_estimate(tm: int, tn: int, c_in_p: int, cbytes: int, out_bytes: int) -> int:
    """Per-step VMEM estimate (double-buffered inputs/outputs + acc + h scratch)."""
    x_b = 2 * tm * c_in_p * cbytes
    w1_b = 2 * c_in_p * tn * cbytes
    w2_b = 2 * tn * c_in_p * cbytes
    bias_b = 2 * (tn + 2 * c_in_p) * cbytes
    out_b = 2 * tm * c_in_p * out_bytes
    acc_b = tm * c_in_p * 4
    h_b = tm * tn * 4  # f32 intermediate between the two matmuls
    return x_b + w1_b + w2_b + bias_b + out_b + acc_b + h_b


def _ffn_kernel(x_ref, w1_ref, b1_ref, w2_ref, b2_ref, o_ref, acc_ref, *, approximate_gelu):
    k = pl.program_id(1)

    @pl.when(k == 0)
    def _init():
        acc_ref[...] = jnp.zeros_like(acc_ref)

    # Linear 1 partial: (tm, C_in_p) @ (C_in_p, tn) -> (tm, tn), f32 accumulate on MXU.
    h = jnp.dot(x_ref[...], w1_ref[...], preferred_element_type=jnp.float32)
    h = h + b1_ref[...].astype(jnp.float32)
    if approximate_gelu:
        # tanh approximation (EUP) -- cheaper on v5e's VALU-limited path.
        h = 0.5 * h * (1.0 + jnp.tanh(0.7978845608028654 * (h + 0.044715 * h * h * h)))
    else:
        # Exact erf-based GELU in f32 -- matches torch.nn.GELU() default.
        h = 0.5 * h * (1.0 + jax.lax.erf(h * 0.7071067811865476))
    # Dropout(p=0.0) is identity in this module's default config.

    # Linear 2 partial: h is cast to the weight compute dtype (bf16 by default),
    # accumulated in f32 across hidden tiles.
    acc_ref[...] += jnp.dot(
        h.astype(w2_ref.dtype), w2_ref[...], preferred_element_type=jnp.float32
    )

    @pl.when(k == pl.num_programs(1) - 1)
    def _finalize():
        o_ref[...] = (acc_ref[...] + b2_ref[...].astype(jnp.float32)).astype(o_ref.dtype)


@functools.partial(
    jax.jit, static_argnames=("tm", "tn", "out_dtype", "approximate_gelu", "vmem_limit")
)
def _ffn_call(x2d, w1p, b1p, w2p, b2p, *, tm, tn, out_dtype, approximate_gelu, vmem_limit):
    M_p, C_in_p = x2d.shape
    C_hid_p = w1p.shape[1]
    grid = (M_p // tm, C_hid_p // tn)

    cbytes = x2d.dtype.itemsize
    out_bytes = jnp.dtype(out_dtype).itemsize
    flops = 4 * M_p * C_hid_p * C_in_p
    bytes_accessed = (
        M_p * C_in_p * cbytes                              # x
        + (M_p // tm) * C_in_p * C_hid_p * cbytes * 2      # w1 + w2 re-streamed per row tile
        + (C_hid_p + C_in_p) * cbytes                      # biases
        + M_p * C_in_p * out_bytes                         # out
    )

    kernel = functools.partial(_ffn_kernel, approximate_gelu=approximate_gelu)
    return pl.pallas_call(
        kernel,
        out_shape=jax.ShapeDtypeStruct((M_p, C_in_p), out_dtype),
        grid_spec=pltpu.PrefetchScalarGridSpec(
            num_scalar_prefetch=0,
            grid=grid,
            in_specs=[
                pl.BlockSpec((tm, C_in_p), lambda i, k: (i, 0)),   # x tile (resident over k)
                pl.BlockSpec((C_in_p, tn), lambda i, k: (0, k)),   # w1 hidden slice
                pl.BlockSpec((1, tn), lambda i, k: (0, k)),        # b1 hidden slice
                pl.BlockSpec((tn, C_in_p), lambda i, k: (k, 0)),   # w2 hidden slice
                pl.BlockSpec((1, C_in_p), lambda i, k: (0, 0)),    # b2 (constant)
            ],
            out_specs=pl.BlockSpec((tm, C_in_p), lambda i, k: (i, 0)),
            scratch_shapes=[pltpu.VMEM((tm, C_in_p), jnp.float32)],
        ),
        compiler_params=pltpu.CompilerParams(
            dimension_semantics=("parallel", "arbitrary"),
            vmem_limit_bytes=vmem_limit,
        ),
        cost_estimate=pl.CostEstimate(
            flops=flops,
            transcendentals=M_p * C_hid_p,
            bytes_accessed=bytes_accessed,
        ),
    )(x2d, w1p, b1p, w2p, b2p)


class FeedForwardPallas:
    """FeedForward: Linear -> GELU -> Dropout(0) -> Linear -> Dropout(0).

    Weights are padded / cast ONCE at construction (hoisted out of the forward
    path); only the activation is padded per call.  w1: (C_in, C_hid),
    w2: (C_hid, C_in); __call__ takes x of shape (B, S, C_in).
    """

    def __init__(self, w1, b1, w2, b2, *, compute_dtype=jnp.bfloat16,
                 tm=512, tn=512, approximate_gelu=False):
        C_in, C_hid = w1.shape
        assert w2.shape == (C_hid, C_in)
        assert b1.shape == (C_hid,) and b2.shape == (C_in,)
        self.C_in, self.C_hid = C_in, C_hid
        self.compute_dtype = jnp.dtype(compute_dtype)
        self.approximate_gelu = bool(approximate_gelu)
        self.tm_req = int(tm)

        # Hidden tile: lane-dense multiple of 128; pad hidden dim to a whole number
        # of tiles once, at construction.
        tn = max(128, _round_up(min(int(tn), _round_up(C_hid, 128)), 128))
        self.tn = tn
        C_in_p = _round_up(C_in, 128)
        C_hid_p = _round_up(C_hid, tn)
        self.C_in_p, self.C_hid_p = C_in_p, C_hid_p

        # Zero-padding is semantics-preserving: padded x cols / w1 rows contribute 0,
        # padded hidden cols have b1=0 so gelu(0)=0 contributes 0 to matmul2, and
        # padded output cols / rows are sliced off in __call__.
        dt = self.compute_dtype
        self.w1p = jnp.pad(w1.astype(dt), ((0, C_in_p - C_in), (0, C_hid_p - C_hid)))
        self.b1p = jnp.pad(b1.astype(dt), (0, C_hid_p - C_hid)).reshape(1, C_hid_p)
        self.w2p = jnp.pad(w2.astype(dt), ((0, C_hid_p - C_hid), (0, C_in_p - C_in)))
        self.b2p = jnp.pad(b2.astype(dt), (0, C_in_p - C_in)).reshape(1, C_in_p)

        self.vmem_budget = _vmem_budget_bytes()

    def __call__(self, x):
        B, S, C_in = x.shape
        assert C_in == self.C_in
        out_dtype = x.dtype
        M = B * S
        cbytes = self.compute_dtype.itemsize
        out_bytes = jnp.dtype(out_dtype).itemsize
        sub = 16 if cbytes == 2 else 8

        # Row tile: as big as weight reuse / VMEM allows (multiple of the sublane packing).
        tm = max(sub, _round_up(min(self.tm_req, _round_up(M, sub)), sub))
        tn = self.tn
        while (tm > sub
               and _vmem_estimate(tm, tn, self.C_in_p, cbytes, out_bytes) > self.vmem_budget):
            tm = max(sub, _round_up(tm // 2, sub))
        while (tn > 128 and self.C_hid_p % (tn // 2) == 0
               and _vmem_estimate(tm, tn, self.C_in_p, cbytes, out_bytes) > self.vmem_budget):
            tn //= 2
        # TODO(synk): for very large C_in (>= ~4096 bf16) on v7x, add a 3rd grid axis
        # tiling the output channels so VMEM stops scaling with the full C_in_p.

        # v7x megacore: keep >= 2 row tiles on the "parallel" axis whenever M allows it.
        if M > sub and _cdiv(_round_up(M, sub), tm) < 2:
            tm = max(sub, _round_up(_cdiv(M, 2), sub))

        M_p = _round_up(M, tm)
        x2d = jnp.pad(
            x.reshape(M, C_in).astype(self.compute_dtype),
            ((0, M_p - M), (0, self.C_in_p - C_in)),
        )

        out2d = _ffn_call(
            x2d, self.w1p, self.b1p, self.w2p, self.b2p,
            tm=tm, tn=tn, out_dtype=out_dtype,
            approximate_gelu=self.approximate_gelu,
            vmem_limit=self.vmem_budget,
        )
        return out2d[:M, :C_in].reshape(B, S, C_in)


# ----------------------------- reference & tests ------------------------------

def _ref_ffn(x, w1, b1, w2, b2):
    h = x @ w1 + b1
    h = 0.5 * h * (1.0 + jax.lax.erf(h / jnp.sqrt(2.0).astype(h.dtype)))
    return h @ w2 + b2


def _init_linear(key, fan_in, fan_out, dtype=jnp.float32):
    # Mimic torch.nn.Linear default init: U(-1/sqrt(fan_in), 1/sqrt(fan_in))
    kw, kb = jax.random.split(key)
    bound = 1.0 / jnp.sqrt(fan_in)
    w = jax.random.uniform(kw, (fan_in, fan_out), dtype, -bound, bound)
    b = jax.random.uniform(kb, (fan_out,), dtype, -bound, bound)
    return w, b


if __name__ == "__main__":
    key = jax.random.PRNGKey(0)

    # --- Test 1: toy shapes, exact f32 compute path ---------------------------
    B, S, C_in, C_hid = 2, 8, 32, 64
    kx, k1, k2, key = jax.random.split(key, 4)
    x = jax.random.normal(kx, (B, S, C_in), jnp.float32)
    w1, b1 = _init_linear(k1, C_in, C_hid)
    w2, b2 = _init_linear(k2, C_hid, C_in)

    ffn_f32 = FeedForwardPallas(w1, b1, w2, b2, compute_dtype=jnp.float32)
    out = ffn_f32(x)
    jax.block_until_ready(out)
    ref = _ref_ffn(x, w1, b1, w2, b2)
    assert out.shape == (B, S, C_in)
    assert jnp.allclose(out, ref, atol=1e-3, rtol=1e-3), "f32 toy check failed"

    # --- Test 2: ragged rows + non-128 channels + multi-step hidden reduction --
    B2, S2, C_in2, C_hid2 = 2, 200, 96, 320
    kx2, k3, k4, key = jax.random.split(key, 4)
    x2 = jax.random.normal(kx2, (B2, S2, C_in2), jnp.float32)
    w1b, b1b = _init_linear(k3, C_in2, C_hid2)
    w2b, b2b = _init_linear(k4, C_hid2, C_in2)

    ffn2 = FeedForwardPallas(w1b, b1b, w2b, b2b, compute_dtype=jnp.float32, tm=256, tn=128)
    out2 = ffn2(x2)
    jax.block_until_ready(out2)
    ref2 = _ref_ffn(x2.reshape(-1, C_in2), w1b, b1b, w2b, b2b).reshape(B2, S2, C_in2)
    assert out2.shape == (B2, S2, C_in2)
    assert jnp.allclose(out2, ref2, atol=1e-3, rtol=1e-3), "f32 tiled check failed"

    # --- Test 3: default bf16 compute path (f32 accumulate), loose tolerance ---
    ffn_bf16 = FeedForwardPallas(w1, b1, w2, b2)  # bf16 default
    out_bf16 = ffn_bf16(x)
    jax.block_until_ready(out_bf16)
    assert jnp.allclose(out_bf16, ref, atol=5e-2, rtol=5e-2), "bf16 check failed"

    # Second call with the same prepared weights (no weight re-pad / re-cast in HBM).
    out_bf16_b = ffn_bf16(x * 0.5)
    jax.block_until_ready(out_bf16_b)

    # TODO(synk): Dropout with p > 0 (training mode) would need pltpu.prng_seed /
    # pltpu.stateful_bernoulli; the module's default p=0.0 (and eval mode) is identity.
    print("KERNEL_OK")
</pallas_src>

<mosaic_0001>
module attributes {stable_mosaic.version = 11 : i64} {
  func.func @_ffn_kernel(%arg0: i32, %arg1: i32, %arg2: memref<8x128xf32, #tpu.memory_space<vmem>>, %arg3: memref<128x128xf32, #tpu.memory_space<vmem>>, %arg4: memref<1x128xf32, #tpu.memory_space<vmem>>, %arg5: memref<128x128xf32, #tpu.memory_space<vmem>>, %arg6: memref<1x128xf32, #tpu.memory_space<vmem>>, %arg7: memref<8x128xf32, #tpu.memory_space<vmem>>, %arg8: memref<8x128xf32, #tpu.memory_space<vmem>>) attributes {dimension_semantics = [#tpu.dimension_semantics<parallel>, #tpu.dimension_semantics<arbitrary>], iteration_bounds = array<i64: 2, 1>, scalar_prefetch = 0 : i64, scratch_operands = 1 : i64, tpu.core_type = #tpu.core_type<tc>, window_params = [{transform_indices = @transform_0, window_bounds = array<i64: 8, 128>}, {transform_indices = @transform_1, window_bounds = array<i64: 128, 128>}, {transform_indices = @transform_2, window_bounds = array<i64: 1, 128>}, {transform_indices = @transform_3, window_bounds = array<i64: 128, 128>}, {pipeline_mode = #tpu.pipeline_mode<synchronous>, transform_indices = @transform_4, window_bounds = array<i64: 1, 128>}, {transform_indices = @transform_5, window_bounds = array<i64: 8, 128>}]} {
    %c0_i32 = arith.constant 0 : i32
    %0 = arith.cmpi eq, %arg1, %c0_i32 : i32
    %1 = arith.extui %0 : i1 to i32
    %c0_i32_0 = arith.constant 0 : i32
    %2 = arith.cmpi ne, %1, %c0_i32_0 : i32
    scf.if %2 {
      %cst_18 = arith.constant 0.000000e+00 : f32
      %25 = vector.broadcast %cst_18 : f32 to vector<8x128xf32>
      %c0_19 = arith.constant 0 : index
      %c0_20 = arith.constant 0 : index
      %26 = vector.load %arg8[%c0_19, %c0_20] : memref<8x128xf32, #tpu.memory_space<vmem>>, vector<8x128xf32>
      tpu.vector_store %arg8[%c0_19, %c0_20], %25 {strides = array<i32>} : memref<8x128xf32, #tpu.memory_space<vmem>>, vector<8x128xf32>,
    } else {
    }
    %c0 = arith.constant 0 : index
    %c0_1 = arith.constant 0 : index
    %3 = vector.load %arg2[%c0, %c0_1] : memref<8x128xf32, #tpu.memory_space<vmem>>, vector<8x128xf32>
    %c0_2 = arith.constant 0 : index
    %c0_3 = arith.constant 0 : index
    %4 = vector.load %arg3[%c0_2, %c0_3] : memref<128x128xf32, #tpu.memory_space<vmem>>, vector<128x128xf32>
    %cst = arith.constant dense<0.000000e+00> : vector<8x128xf32>
    %5 = tpu.matmul %3, %4, %cst {dimension_numbers = #tpu.dot_dimension_numbers<[1], [0], [0], [1], [0, 0, 1, 1], [], []>} : vector<8x128xf32>, vector<128x128xf32>, vector<8x128xf32> -> vector<8x128xf32>
    %c0_4 = arith.constant 0 : index
    %c0_5 = arith.constant 0 : index
    %6 = vector.load %arg4[%c0_4, %c0_5] : memref<1x128xf32, #tpu.memory_space<vmem>>, vector<1x128xf32>
    %7 = vector.broadcast %6 : vector<1x128xf32> to vector<8x128xf32>
    %8 = arith.addf %5, %7 : vector<8x128xf32>
    %cst_6 = arith.constant 5.000000e-01 : f32
    %9 = vector.broadcast %cst_6 : f32 to vector<8x128xf32>
    %10 = arith.mulf %9, %8 : vector<8x128xf32>
    %cst_7 = arith.constant 0.707106769 : f32
    %11 = vector.broadcast %cst_7 : f32 to vector<8x128xf32>
    %12 = arith.mulf %8, %11 : vector<8x128xf32>
    %13 = math.erf %12 : vector<8x128xf32>
    %cst_8 = arith.constant 1.000000e+00 : f32
    %14 = vector.broadcast %cst_8 : f32 to vector<8x128xf32>
    %15 = arith.addf %14, %13 : vector<8x128xf32>
    %16 = arith.mulf %10, %15 : vector<8x128xf32>
    %c0_9 = arith.constant 0 : index
    %c0_10 = arith.constant 0 : index
    %17 = vector.load %arg8[%c0_9, %c0_10] : memref<8x128xf32, #tpu.memory_space<vmem>>, vector<8x128xf32>
    %c0_11 = arith.constant 0 : index
    %c0_12 = arith.constant 0 : index
    %18 = vector.load %arg5[%c0_11, %c0_12] : memref<128x128xf32, #tpu.memory_space<vmem>>, vector<128x128xf32>
    %cst_13 = arith.constant dense<0.000000e+00> : vector<8x128xf32>
    %19 = tpu.matmul %16, %18, %cst_13 {dimension_numbers = #tpu.dot_dimension_numbers<[1], [0], [0], [1], [0, 0, 1, 1], [], []>} : vector<8x128xf32>, vector<128x128xf32>, vector<8x128xf32> -> vector<8x128xf32>
    %20 = arith.addf %17, %19 : vector<8x128xf32>
    %c0_14 = arith.constant 0 : index
    %c0_15 = arith.constant 0 : index
    %21 = vector.load %arg8[%c0_14, %c0_15] : memref<8x128xf32, #tpu.memory_space<vmem>>, vector<8x128xf32>
    tpu.vector_store %arg8[%c0_14, %c0_15], %20 {strides = array<i32>} : memref<8x128xf32, #tpu.memory_space<vmem>>, vector<8x128xf32>,
    %c0_i32_16 = arith.constant 0 : i32
    %22 = arith.cmpi eq, %arg1, %c0_i32_16 : i32
    %23 = arith.extui %22 : i1 to i32
    %c0_i32_17 = arith.constant 0 : i32
    %24 = arith.cmpi ne, %23, %c0_i32_17 : i32
    scf.if %24 {
      %c0_18 = arith.constant 0 : index
      %c0_19 = arith.constant 0 : index
      %25 = vector.load %arg8[%c0_18, %c0_19] : memref<8x128xf32, #tpu.memory_space<vmem>>, vector<8x128xf32>
      %c0_20 = arith.constant 0 : index
      %c0_21 = arith.constant 0 : index
      %26 = vector.load %arg6[%c0_20, %c0_21] : memref<1x128xf32, #tpu.memory_space<vmem>>, vector<1x128xf32>
      %27 = vector.broadcast %26 : vector<1x128xf32> to vector<8x128xf32>
      %28 = arith.addf %25, %27 : vector<8x128xf32>
      %c0_22 = arith.constant 0 : index
      %c0_23 = arith.constant 0 : index
      %29 = vector.load %arg7[%c0_22, %c0_23] : memref<8x128xf32, #tpu.memory_space<vmem>>, vector<8x128xf32>
      tpu.vector_store %arg7[%c0_22, %c0_23], %28 {strides = array<i32>} : memref<8x128xf32, #tpu.memory_space<vmem>>, vector<8x128xf32>,
    } else {
    }
    return
  }
  func.func @transform_0(%arg0: i32, %arg1: i32) -> (i32, i32) {
    %c0_i32 = arith.constant 0 : i32
    %c0_i32_0 = arith.constant 0 : i32
    return %arg0, %c0_i32 : i32, i32
  }
  func.func @transform_1(%arg0: i32, %arg1: i32) -> (i32, i32) {
    %c0_i32 = arith.constant 0 : i32
    %c0_i32_0 = arith.constant 0 : i32
    return %c0_i32, %arg1 : i32, i32
  }
  func.func @transform_2(%arg0: i32, %arg1: i32) -> (i32, i32) {
    %c0_i32 = arith.constant 0 : i32
    %c0_i32_0 = arith.constant 0 : i32
    return %c0_i32, %arg1 : i32, i32
  }
  func.func @transform_3(%arg0: i32, %arg1: i32) -> (i32, i32) {
    %c0_i32 = arith.constant 0 : i32
    %c0_i32_0 = arith.constant 0 : i32
    return %arg1, %c0_i32 : i32, i32
  }
  func.func @transform_4(%arg0: i32, %arg1: i32) -> (i32, i32) {
    %c0_i32 = arith.constant 0 : i32
    %c0_i32_0 = arith.constant 0 : i32
    %c0_i32_1 = arith.constant 0 : i32
    return %c0_i32, %c0_i32_0 : i32, i32
  }
  func.func @transform_5(%arg0: i32, %arg1: i32) -> (i32, i32) {
    %c0_i32 = arith.constant 0 : i32
    %c0_i32_0 = arith.constant 0 : i32
    return %arg0, %c0_i32 : i32, i32
  }
}

</mosaic_0001>

<llo_original>
// kernel: _ffn_call.1
$region0: #{_ffn_call.1}
  #allocation0 [shape = 'u32[]', space=smem, size = 0x4, offset = 0x4, fixed_abs, tag = 'smem constant byte address 0x4 - core index']
  #allocation1 [shape = 'u32[144,128]{1,0:T(1,128)}', space=vmem, size = 0x12000, scoped, tag = 'internal scratch']
  #allocation2 [shape = 'f32[8,128]{1,0:T(8,128)}', space=vmem, size = 0x1000, scoped, tag = 'scratch operand']
  %s0 = inlined_call_operand.hbm [shape: f32[16,128], index: 0, kind: input, shape index: {}]
  %s1 = inlined_call_operand.hbm [shape: f32[128,128], index: 1, kind: input, shape index: {}]
  %s2 = inlined_call_operand.vmem [shape: f32[1,128], index: 2, kind: input, shape index: {}]
  %s3 = inlined_call_operand.hbm [shape: f32[128,128], index: 3, kind: input, shape index: {}]
  %s4 = inlined_call_operand.vmem [shape: f32[1,128], index: 4, kind: input, shape index: {}]
  %s5 = inlined_call_operand.hbm [shape: f32[16,128], index: 5, kind: output, shape index: {}]
  %s6 = sld [smem:[#allocation0]]
  $region73: #{_ffn_call.1} parent=0
    _
  %s8 = ssub.s32 1, %s6
  %s9 = scalar_select 0, %s8, %s6
  $region1: #{_ffn_call.1} parent=0
    #allocation3 [shape = 'u8[8192]{0}', space=vmem, size = 0x2000, scoped, tag = 'input window, operand 0']
    #allocation4 [shape = 's32[2]{0}', space=sflag, size = 0x8, scoped, tag = 'scoped memory for _ffn_call.1']
    #allocation5 [shape = 's32[2]{0}', space=sflag, size = 0x8, scoped, tag = 'scoped memory for _ffn_call.1']
    #allocation6 [shape = 'u8[65536]{0}', space=vmem, size = 0x10000, scoped, tag = 'input window, operand 1, single buffered']
    #allocation7 [shape = 's32[1]{0}', space=sflag, size = 0x4, scoped, tag = 'scoped memory for _ffn_call.1']
    #allocation8 [shape = 'u8[65536]{0}', space=vmem, size = 0x10000, scoped, tag = 'input window, operand 3, single buffered']
    #allocation9 [shape = 'u8[8192]{0}', space=vmem, size = 0x2000, scoped, tag = 'output window, operand 0']
    %10 = vsyncpa [#allocation4], 0
    %s11 = scalar_lea.sflag [#allocation4], 1
    %12 = vsyncpa %s11, 0
    %13 = vsyncpa [#allocation7], 0
    %14 = vsyncpa [#allocation5], 0
    %s15 = scalar_lea.sflag [#allocation5], 1
    %16 = vsyncpa %s15, 0
    loop: start=0, step=1, limit=4
    $region2: #{_ffn_call.1} parent=1 // loop_pre_header
      _
    $region3: #{_ffn_call.1} parent=1 // loop_header
      %s18 = sphi 0, %s22
      %p19 = scmp.ge.s32.totalorder %s18, 4
      %s25 = sphi 0, %s37
      %s26 = sphi 0, %s33
      %s27 = sphi 0, %s25
      %s28 = sphi 0, %s26
      %s29 = sphi 0, %s27
      %s30 = sphi 0, %s28
      %s40 = sphi 0, %s42
      %s43 = sphi 0, %s40
      %s44 = sphi 0, %s43
      %s60 = sphi 0, %s44
      %s66 = sphi 0, %s68
      %s69 = sphi 0, %s66
      %s70 = sphi 0, %s69
      %s86 = sphi 0, %s70
      %s92 = sphi 0, %s94
      %s95 = sphi 0, %s92
      %s96 = sphi 0, %s95
      %s112 = sphi 0, %s96
      %s118 = sphi 0, %s120
      %s121 = sphi 0, %s118
      %s122 = sphi 0, %s121
      %s138 = sphi 0, %s122
      %s142 = sphi 0, %s142
      %s144 = sphi 0, %s142
      %s145 = sphi 0, %s144
      %s159 = sphi 0, %s145
      %s165 = sphi 0, %s167
      %s168 = sphi 0, %s165
      %s169 = sphi 0, %s168
      %s185 = sphi 0, %s169
    $region4: #{_ffn_call.1} parent=1 // loop_header_branch
      %21 = sbr.rel (%p19) target = $region8
    $region5: #{_ffn_call.1} parent=1 // loop_body
      %s23 = ssub.s32 %s18, 1
      %s24 = ssub.s32 %s18, 2
      %s31 = sadd.s32 1, %s26
      %p32 = scmp.ge.s32.totalorder %s31, 1
      %s33 = scalar_select %p32, 0, %s31
      %s34 = sadd.s32 1, %s25
      %s35 = scalar_select %p32, %s34, %s25
      %p36 = scmp.ge.s32.totalorder %s35, 2
      %s37 = scalar_select %p36, 0, %s35
      %s38 = ssub.s32 %s25, %s37
      %p39 = scmp.eq.s32.totalorder %s38, 0
      %s41 = sadd.s32 %s40, 1
      %s42 = scalar_select %p39, %s40, %s41
      %p45 = pneg %p39
      %p46 = scmp.eq.s32.totalorder %s18, 1
      %p47 = por %p45, %p46
      %p48 = scmp.ne.s32.totalorder %s40, %s43
      %p49 = scmp.eq.s32.totalorder %s18, 0
      %p50 = por %p48, %p49
      %p51 = scmp.ne.s32.totalorder %s40, %s43
      %p52 = scmp.eq.s32.totalorder %s23, 1
      %p53 = por %p51, %p52
      %p54 = scmp.ne.s32.totalorder %s43, %s44
      %p55 = scmp.eq.s32.totalorder %s23, 0
      %p56 = por %p54, %p55
      %p57 = scmp.ne.s32.totalorder %s43, %s44
      %p58 = scmp.eq.s32.totalorder %s24, 1
      %p59 = por %p57, %p58
      %p61 = scmp.ne.s32.totalorder %s44, %s60
      %p62 = scmp.eq.s32.totalorder %s24, 0
      %p63 = por %p61, %p62
      %s64 = ssub.s32 %s26, %s33
      %p65 = scmp.eq.s32.totalorder %s64, 0
      %s67 = sadd.s32 %s66, 1
      %s68 = scalar_select %p65, %s66, %s67
      %p71 = pneg %p65
      %p72 = scmp.eq.s32.totalorder %s18, 1
      %p73 = por %p71, %p72
      %p74 = scmp.ne.s32.totalorder %s66, %s69
      %p75 = scmp.eq.s32.totalorder %s18, 0
      %p76 = por %p74, %p75
      %p77 = scmp.ne.s32.totalorder %s66, %s69
      %p78 = scmp.eq.s32.totalorder %s23, 1
      %p79 = por %p77, %p78
      %p80 = scmp.ne.s32.totalorder %s69, %s70
      %p81 = scmp.eq.s32.totalorder %s23, 0
      %p82 = por %p80, %p81
      %p83 = scmp.ne.s32.totalorder %s69, %s70
      %p84 = scmp.eq.s32.totalorder %s24, 1
      %p85 = por %p83, %p84
      %p87 = scmp.ne.s32.totalorder %s70, %s86
      %p88 = scmp.eq.s32.totalorder %s24, 0
      %p89 = por %p87, %p88
      %s90 = ssub.s32 %s26, %s33
      %p91 = scmp.eq.s32.totalorder %s90, 0
      %s93 = sadd.s32 %s92, 1
      %s94 = scalar_select %p91, %s92, %s93
      %p97 = pneg %p91
      %p98 = scmp.eq.s32.totalorder %s18, 1
      %p99 = por %p97, %p98
      %p100 = scmp.ne.s32.totalorder %s92, %s95
      %p101 = scmp.eq.s32.totalorder %s18, 0
      %p102 = por %p100, %p101
      %p103 = scmp.ne.s32.totalorder %s92, %s95
      %p104 = scmp.eq.s32.totalorder %s23, 1
      %p105 = por %p103, %p104
      %p106 = scmp.ne.s32.totalorder %s95, %s96
      %p107 = scmp.eq.s32.totalorder %s23, 0
      %p108 = por %p106, %p107
      %p109 = scmp.ne.s32.totalorder %s95, %s96
      %p110 = scmp.eq.s32.totalorder %s24, 1
      %p111 = por %p109, %p110
      %p113 = scmp.ne.s32.totalorder %s96, %s112
      %p114 = scmp.eq.s32.totalorder %s24, 0
      %p115 = por %p113, %p114
      %s116 = ssub.s32 %s26, %s33
      %p117 = scmp.eq.s32.totalorder %s116, 0
      %s119 = sadd.s32 %s118, 1
      %s120 = scalar_select %p117, %s118, %s119
      %p123 = pneg %p117
      %p124 = scmp.eq.s32.totalorder %s18, 1
      %p125 = por %p123, %p124
      %p126 = scmp.ne.s32.totalorder %s118, %s121
      %p127 = scmp.eq.s32.totalorder %s18, 0
      %p128 = por %p126, %p127
      %p129 = scmp.ne.s32.totalorder %s118, %s121
      %p130 = scmp.eq.s32.totalorder %s23, 1
      %p131 = por %p129, %p130
      %p132 = scmp.ne.s32.totalorder %s121, %s122
      %p133 = scmp.eq.s32.totalorder %s23, 0
      %p134 = por %p132, %p133
      %p135 = scmp.ne.s32.totalorder %s121, %s122
      %p136 = scmp.eq.s32.totalorder %s24, 1
      %p137 = por %p135, %p136
      %p139 = scmp.ne.s32.totalorder %s122, %s138
      %p140 = scmp.eq.s32.totalorder %s24, 0
      %p141 = por %p139, %p140
      %s143 = sadd.s32 %s142, 1
      %p146 = scmp.eq.s32.totalorder %s18, 1
      %p147 = scmp.ne.s32.totalorder %s142, %s144
      %p148 = scmp.eq.s32.totalorder %s18, 0
      %p149 = por %p147, %p148
      %p150 = scmp.ne.s32.totalorder %s142, %s144
      %p151 = scmp.eq.s32.totalorder %s23, 1
      %p152 = por %p150, %p151
      %p153 = scmp.ne.s32.totalorder %s144, %s145
      %p154 = scmp.eq.s32.totalorder %s23, 0
      %p155 = por %p153, %p154
      %p156 = scmp.ne.s32.totalorder %s144, %s145
      %p157 = scmp.eq.s32.totalorder %s24, 1
      %p158 = por %p156, %p157
      %p160 = scmp.ne.s32.totalorder %s145, %s159
      %p161 = scmp.eq.s32.totalorder %s24, 0
      %p162 = por %p160, %p161
      %s163 = ssub.s32 %s25, %s37
      %p164 = scmp.eq.s32.totalorder %s163, 0
      %s166 = sadd.s32 %s165, 1
      %s167 = scalar_select %p164, %s165, %s166
      %p170 = pneg %p164
      %p171 = scmp.eq.s32.totalorder %s18, 1
      %p172 = por %p170, %p171
      %p173 = scmp.ne.s32.totalorder %s165, %s168
      %p174 = scmp.eq.s32.totalorder %s18, 0
      %p175 = por %p173, %p174
      %p176 = scmp.ne.s32.totalorder %s165, %s168
      %p177 = scmp.eq.s32.totalorder %s23, 1
      %p178 = por %p176, %p177
      %p179 = scmp.ne.s32.totalorder %s168, %s169
      %p180 = scmp.eq.s32.totalorder %s23, 0
      %p181 = por %p179, %p180
      %p182 = scmp.ne.s32.totalorder %s168, %s169
      %p183 = scmp.eq.s32.totalorder %s24, 1
      %p184 = por %p182, %p183
      %p186 = scmp.ne.s32.totalorder %s169, %s185
      %p187 = scmp.eq.s32.totalorder %s24, 0
      %p188 = por %p186, %p187
      %p189 = scmp.le.s32.totalorder 1, %s18
      %p190 = scmp.lt.s32.totalorder %s18, 3
      %p191 = pnand %p189, %p190
      %p192 = pneg %p191
      // Predicated region
      $region9: #{_ffn_call.1} parent=5 // pred_check
        _
      $region10: #{_ffn_call.1} parent=5 // pred_check_branch
        %194 = sbr.rel (%p191) target = $region12
      $region11: #{_ffn_call.1} parent=5 // pred_region
        %s195 = ssub.s32 %s18, 1
        // Predicated region
        $region13: #{_ffn_call.1} parent=11 // pred_check
          %p196 = pneg %p82
        $region14: #{_ffn_call.1} parent=11 // pred_check_branch
          %198 = sbr.rel (%p196) target = $region16
        $region15: #{_ffn_call.1} parent=11 // pred_region
          %s200 = ssub.s32 2048, 2048
          %201 = vsyncadd [#allocation7], %s200
          %s202 = smul.addr %s28, 128
          %s203 = scalar_lea.hbm %s1, %s202
          %s204 = sshll.u32 [#allocation6], 4
          %s205 = int_to_ptr.vmem [resolvable:$true] %s204
          %210 = dma.hbm_to_vmem [thread:$0]  %s203, 2048, %s205, [#allocation7], 128, 128, 8
        $region16: #{_ffn_call.1} parent=11 // pred_fallthru
          _
        // Predicated region
        $region17: #{_ffn_call.1} parent=11 // pred_check
          %p211 = pneg %p108
        $region18: #{_ffn_call.1} parent=11 // pred_check_branch
          %213 = sbr.rel (%p211) target = $region20
        $region19: #{_ffn_call.1} parent=11 // pred_region
          %p214 = scmp.lt.s32.totalorder %s28, 0
          %s215 = scalar_select %p214, %s28, 0
          %s216 = scalar_lea.vmem %s2, %s215
        $region20: #{_ffn_call.1} parent=11 // pred_fallthru
          _
        // Predicated region
        $region21: #{_ffn_call.1} parent=11 // pred_check
          %p217 = pneg %p134
        $region22: #{_ffn_call.1} parent=11 // pred_check_branch
          %219 = sbr.rel (%p217) target = $region24
        $region23: #{_ffn_call.1} parent=11 // pred_region
          %s220 = smul.u32 16, %s28
          %s222 = ssub.s32 2048, 2048
          %223 = vsyncadd [#allocation7], %s222
          %s224 = smul.addr %s220, 128
          %s225 = scalar_lea.hbm %s3, %s224
          %s226 = sshll.u32 [#allocation8], 4
          %s227 = int_to_ptr.vmem [resolvable:$true] %s226
          %232 = dma.hbm_to_vmem [thread:$0]  %s225, 2048, %s227, [#allocation7], 128, 128, 8
        $region24: #{_ffn_call.1} parent=11 // pred_fallthru
          _
        // Predicated region
        $region25: #{_ffn_call.1} parent=11 // pred_check
          %p233 = pneg %p155
        $region26: #{_ffn_call.1} parent=11 // pred_check_branch
          %235 = sbr.rel (%p233) target = $region28
        $region27: #{_ffn_call.1} parent=11 // pred_region
          _
        $region28: #{_ffn_call.1} parent=11 // pred_fallthru
          _
      $region12: #{_ffn_call.1} parent=5 // pred_fallthru
        _
      %p236 = scmp.lt.s32.totalorder %s18, 2
      // Predicated region
      $region29: #{_ffn_call.1} parent=5 // pred_check
        %p237 = pneg %p236
      $region30: #{_ffn_call.1} parent=5 // pred_check_branch
        %239 = sbr.rel (%p237) target = $region32
      $region31: #{_ffn_call.1} parent=5 // pred_region
        // Predicated region
        $region33: #{_ffn_call.1} parent=31 // pred_check
          %p240 = pneg %p50
        $region34: #{_ffn_call.1} parent=31 // pred_check_branch
          %242 = sbr.rel (%p240) target = $region36
        $region35: #{_ffn_call.1} parent=31 // pred_region
          %s243 = sand.u32 %s40, 1
          %s244 = scalar_lea.sflag [#allocation4], %s243
          %s245 = sand.u32 %s40, 1
          %s246 = smul.addr %s245, 8
          %s247 = scalar_lea.vmem [#allocation3], %s246
          %s249 = ssub.s32 128, 128
          %250 = vsyncadd %s244, %s249
          %s251 = smul.addr %s25, 128
          %s252 = scalar_lea.hbm %s0, %s251
          %s254 = sshll.u32 %s247, 4
          %s255 = int_to_ptr.vmem [resolvable:$true] %s254
          %257 = dma.hbm_to_vmem [thread:$0]  %s252, 128, %s255, %s244
        $region36: #{_ffn_call.1} parent=31 // pred_fallthru
          _
      $region32: #{_ffn_call.1} parent=5 // pred_fallthru
        _
      %p258 = scmp.le.s32.totalorder 1, %s18
      %p259 = scmp.lt.s32.totalorder %s18, 3
      %p260 = pnand %p258, %p259
      %p261 = pneg %p260
      // Predicated region
      $region37: #{_ffn_call.1} parent=5 // pred_check
        _
      $region38: #{_ffn_call.1} parent=5 // pred_check_branch
        %263 = sbr.rel (%p260) target = $region40
      $region39: #{_ffn_call.1} parent=5 // pred_region
        %s264 = ssub.s32 %s18, 1
        %s265 = sand.u32 %s43, 1
        %s266 = scalar_lea.sflag [#allocation4], %s265
        %s267 = sand.u32 %s43, 1
        %s268 = smul.addr %s267, 8
        %s269 = scalar_lea.vmem [#allocation3], %s268
        // Predicated region
        $region41: #{_ffn_call.1} parent=39 // pred_check
          %p270 = pneg %p56
        $region42: #{_ffn_call.1} parent=39 // pred_check_branch
          %272 = sbr.rel (%p270) target = $region44
        $region43: #{_ffn_call.1} parent=39 // pred_region
          %273 = dma.done %s266, 128
        $region44: #{_ffn_call.1} parent=39 // pred_fallthru
          _
        // Predicated region
        $region45: #{_ffn_call.1} parent=39 // pred_check
          %p274 = pneg %p82
        $region46: #{_ffn_call.1} parent=39 // pred_check_branch
          %276 = sbr.rel (%p274) target = $region48
        $region47: #{_ffn_call.1} parent=39 // pred_region
          %277 = dma.done [#allocation7], 2048
        $region48: #{_ffn_call.1} parent=39 // pred_fallthru
          _
        // Predicated region
        $region49: #{_ffn_call.1} parent=39 // pred_check
          %p278 = pneg %p134
        $region50: #{_ffn_call.1} parent=39 // pred_check_branch
          %280 = sbr.rel (%p278) target = $region52
        $region51: #{_ffn_call.1} parent=39 // pred_region
          %281 = dma.done [#allocation7], 2048
        $region52: #{_ffn_call.1} parent=39 // pred_fallthru
          _
        %s282 = sand.u32 %s43, 1
        %s283 = scalar_lea.sflag [#allocation4], %s282
        %s284 = sand.u32 %s43, 1
        %s285 = smul.addr %s284, 8
        %s286 = scalar_lea.vmem [#allocation3], %s285
        %p287 = pneg %p56
        %p288 = pneg %p53
        %p289 = pneg %p82
        %p290 = pneg %p79
        %p291 = scmp.lt.s32.totalorder %s28, 0
        %s292 = scalar_select %p291, %s28, 0
        %s293 = scalar_lea.vmem %s2, %s292
        %p294 = pneg %p108
        %p295 = pneg %p105
        %p296 = pneg %p134
        %p297 = pneg %p131
        %p298 = pneg %p155
        %p299 = pneg %p152
        %p300 = pneg %p181
        %p301 = pneg %p178
        %s302 = sand.u32 %s168, 1
        %s303 = scalar_lea.sflag [#allocation5], %s302
        %s304 = sand.u32 %s168, 1
        %s305 = smul.addr %s304, 8
        %s306 = scalar_lea.vmem [#allocation9], %s305
        %p307 = scmp.lt.s32.totalorder %s28, 0
        %s308 = scalar_select %p307, %s28, 0
        %s309 = scalar_lea.vmem %s2, %s308
        %s310 = smul.u32 16, %s28
        %p311 = scmp.eq.s32.totalorder %s28, 0
        // Predicated region
        $region53: #{_ffn_call.1} parent=39 // pred_check
          %p312 = pneg %p311
        $region54: #{_ffn_call.1} parent=39 // pred_check_branch
          %314 = sbr.rel (%p312) target = $region56
        $region55: #{_ffn_call.1} parent=39 // pred_region
          %315 = vst [vmem:[#allocation2] sm:$0xff] 0.0
        $region56: #{_ffn_call.1} parent=39 // pred_fallthru
          _
        %v316 = vld [vmem:[%s269] sm:$0xff]
        %v317 = vld [vmem:[#allocation6] sm:$0xff]
        %v318 = vld [vmem:[#allocation6 + $0x8] sm:$0xff]
        %v319 = vld [vmem:[#allocation6 + $0x10] sm:$0xff]
        %v320 = vld [vmem:[#allocation6 + $0x18] sm:$0xff]
        %v321 = vld [vmem:[#allocation6 + $0x20] sm:$0xff]
        %v322 = vld [vmem:[#allocation6 + $0x28] sm:$0xff]
        %v323 = vld [vmem:[#allocation6 + $0x30] sm:$0xff]
        %v324 = vld [vmem:[#allocation6 + $0x38] sm:$0xff]
        %v325 = vld [vmem:[#allocation6 + $0x40] sm:$0xff]
        %v326 = vld [vmem:[#allocation6 + $0x48] sm:$0xff]
        %v327 = vld [vmem:[#allocation6 + $0x50] sm:$0xff]
        %v328 = vld [vmem:[#allocation6 + $0x58] sm:$0xff]
        %v329 = vld [vmem:[#allocation6 + $0x60] sm:$0xff]
        %v330 = vld [vmem:[#allocation6 + $0x68] sm:$0xff]
        %v331 = vld [vmem:[#allocation6 + $0x70] sm:$0xff]
        %v332 = vld [vmem:[#allocation6 + $0x78] sm:$0xff]
        %v333 = vld [vmem:[%s309] sm:$0x1]
        %v335 = vlaneseq
        %v336 = vshrl.u32 %v335, 7
        %v337 = vsub.s32 0, %v336
        %v338 = vrot.slane %v333, %v337
        %340 = vmatprep.subr.mxu0 0.0
        %341 = vmatpush1.msra.mxu0 %v317
        %342 = vmatprep.subr.mxu0 0.0
        %343 = vmatpush1.msra.mxu0 %v318
        %344 = vmatprep.subr.mxu0 0.0
        %345 = vmatpush1.msra.mxu0 %v319
        %346 = vmatprep.subr.mxu0 0.0
        %347 = vmatpush1.msra.mxu0 %v320
        %348 = vmatprep.subr.mxu0 0.0
        %349 = vmatpush1.msra.mxu0 %v321
        %350 = vmatprep.subr.mxu0 0.0
        %351 = vmatpush1.msra.mxu0 %v322
        %352 = vmatprep.subr.mxu0 0.0
        %353 = vmatpush1.msra.mxu0 %v323
        %354 = vmatprep.subr.mxu0 0.0
        %355 = vmatpush1.msra.mxu0 %v324
        %356 = vmatprep.subr.mxu0 0.0
        %357 = vmatpush1.msra.mxu0 %v325
        %358 = vmatprep.subr.mxu0 0.0
        %359 = vmatpush1.msra.mxu0 %v326
        %360 = vmatprep.subr.mxu0 0.0
        %361 = vmatpush1.msra.mxu0 %v327
        %362 = vmatprep.subr.mxu0 0.0
        %363 = vmatpush1.msra.mxu0 %v328
        %364 = vmatprep.subr.mxu0 0.0
        %365 = vmatpush1.msra.mxu0 %v329
        %366 = vmatprep.subr.mxu0 0.0
        %367 = vmatpush1.msra.mxu0 %v330
        %368 = vmatprep.subr.mxu0 0.0
        %369 = vmatpush1.msra.mxu0 %v331
        %370 = vmatprep.subr.mxu0 0.0
        %371 = vmatpush1.msra.mxu0 %v332
        %372 = vmatprep.subr.mxu0 0.0
        %373 = vmatpush1.msra.mxu0 0.0
        %374 = vmatprep.subr.mxu0 0.0
        %375 = vmatpush1.msra.mxu0 0.0
        %376 = vmatprep.subr.mxu0 0.0
        %377 = vmatpush1.msra.mxu0 0.0
        %378 = vmatprep.subr.mxu0 0.0
        %379 = vmatpush1.msra.mxu0 0.0
        %380 = vmatprep.subr.mxu0 0.0
        %381 = vmatpush1.msra.mxu0 0.0
        %382 = vmatprep.subr.mxu0 0.0
        %383 = vmatpush1.msra.mxu0 0.0
        %384 = vmatprep.subr.mxu0 0.0
        %385 = vmatpush1.msra.mxu0 0.0
        %386 = vmatprep.subr.mxu0 0.0
        %387 = vmatpush1.msra.mxu0 0.0
        %388 = vmatprep.subr.mxu0 0.0
        %389 = vmatpush1.msra.mxu0 0.0
        %390 = vmatprep.subr.mxu0 0.0
        %391 = vmatpush1.msra.mxu0 0.0
        %392 = vmatprep.subr.mxu0 0.0
        %393 = vmatpush1.msra.mxu0 0.0
        %394 = vmatprep.subr.mxu0 0.0
        %395 = vmatpush1.msra.mxu0 0.0
        %396 = vmatprep.subr.mxu0 0.0
        %397 = vmatpush1.msra.mxu0 0.0
        %398 = vmatprep.subr.mxu0 0.0
        %399 = vmatpush1.msra.mxu0 0.0
        %400 = vmatprep.subr.mxu0 0.0
        %401 = vmatpush1.msra.mxu0 0.0
        %402 = vmatprep.subr.mxu0 0.0
        %403 = vmatpush1.msra.mxu0 0.0
        %404 = vmatprep.mubr.f32.mxu0 0.0
        %405 = vmatmul.mubr.f32.gmra.mrb[0].mxu0 %v316
        %v406 = vpop.f32.mrb[0].mxu0
        %v407 = vadd.f32 %v338, %v406
        %v408 = vpop.f32.mrb[0].mxu0
        %409 = vdwg.mxu0
        %v410 = vmul.f32 %v407, 0.5
        %v411 = vmul.f32 %v407, 0.70710677
        %v412 = verf.f32.pop %v411
        %v413 = vadd.f32 %v412, 1.0
        %v414 = vmul.f32 %v410, %v413
        %v415 = vld [vmem:[#allocation2] sm:$0xff]
        %v416 = vld [vmem:[#allocation8] sm:$0xff]
        %v417 = vld [vmem:[#allocation8 + $0x8] sm:$0xff]
        %v418 = vld [vmem:[#allocation8 + $0x10] sm:$0xff]
        %v419 = vld [vmem:[#allocation8 + $0x18] sm:$0xff]
        %v420 = vld [vmem:[#allocation8 + $0x20] sm:$0xff]
        %v421 = vld [vmem:[#allocation8 + $0x28] sm:$0xff]
        %v422 = vld [vmem:[#allocation8 + $0x30] sm:$0xff]
        %v423 = vld [vmem:[#allocation8 + $0x38] sm:$0xff]
        %v424 = vld [vmem:[#allocation8 + $0x40] sm:$0xff]
        %v425 = vld [vmem:[#allocation8 + $0x48] sm:$0xff]
        %v426 = vld [vmem:[#allocation8 + $0x50] sm:$0xff]
        %v427 = vld [vmem:[#allocation8 + $0x58] sm:$0xff]
        %v428 = vld [vmem:[#allocation8 + $0x60] sm:$0xff]
        %v429 = vld [vmem:[#allocation8 + $0x68] sm:$0xff]
        %v430 = vld [vmem:[#allocation8 + $0x70] sm:$0xff]
        %v431 = vld [vmem:[#allocation8 + $0x78] sm:$0xff]
        %432 = vmatprep.subr.mxu0 0.0
        %433 = vmatpush1.msra.mxu0 %v416
        %434 = vmatprep.subr.mxu0 0.0
        %435 = vmatpush1.msra.mxu0 %v417
        %436 = vmatprep.subr.mxu0 0.0
        %437 = vmatpush1.msra.mxu0 %v418
        %438 = vmatprep.subr.mxu0 0.0
        %439 = vmatpush1.msra.mxu0 %v419
        %440 = vmatprep.subr.mxu0 0.0
        %441 = vmatpush1.msra.mxu0 %v420
        %442 = vmatprep.subr.mxu0 0.0
        %443 = vmatpush1.msra.mxu0 %v421
        %444 = vmatprep.subr.mxu0 0.0
        %445 = vmatpush1.msra.mxu0 %v422
        %446 = vmatprep.subr.mxu0 0.0
        %447 = vmatpush1.msra.mxu0 %v423
        %448 = vmatprep.subr.mxu0 0.0
        %449 = vmatpush1.msra.mxu0 %v424
        %450 = vmatprep.subr.mxu0 0.0
        %451 = vmatpush1.msra.mxu0 %v425
        %452 = vmatprep.subr.mxu0 0.0
        %453 = vmatpush1.msra.mxu0 %v426
        %454 = vmatprep.subr.mxu0 0.0
        %455 = vmatpush1.msra.mxu0 %v427
        %456 = vmatprep.subr.mxu0 0.0
        %457 = vmatpush1.msra.mxu0 %v428
        %458 = vmatprep.subr.mxu0 0.0
        %459 = vmatpush1.msra.mxu0 %v429
        %460 = vmatprep.subr.mxu0 0.0
        %461 = vmatpush1.msra.mxu0 %v430
        %462 = vmatprep.subr.mxu0 0.0
        %463 = vmatpush1.msra.mxu0 %v431
        %464 = vmatprep.subr.mxu0 0.0
        %465 = vmatpush1.msra.mxu0 0.0
        %466 = vmatprep.subr.mxu0 0.0
        %467 = vmatpush1.msra.mxu0 0.0
        %468 = vmatprep.subr.mxu0 0.0
        %469 = vmatpush1.msra.mxu0 0.0
        %470 = vmatprep.subr.mxu0 0.0
        %471 = vmatpush1.msra.mxu0 0.0
        %472 = vmatprep.subr.mxu0 0.0
        %473 = vmatpush1.msra.mxu0 0.0
        %474 = vmatprep.subr.mxu0 0.0
        %475 = vmatpush1.msra.mxu0 0.0
        %476 = vmatprep.subr.mxu0 0.0
        %477 = vmatpush1.msra.mxu0 0.0
        %478 = vmatprep.subr.mxu0 0.0
        %479 = vmatpush1.msra.mxu0 0.0
        %480 = vmatprep.subr.mxu0 0.0
        %481 = vmatpush1.msra.mxu0 0.0
        %482 = vmatprep.subr.mxu0 0.0
        %483 = vmatpush1.msra.mxu0 0.0
        %484 = vmatprep.subr.mxu0 0.0
        %485 = vmatpush1.msra.mxu0 0.0
        %486 = vmatprep.subr.mxu0 0.0
        %487 = vmatpush1.msra.mxu0 0.0
        %488 = vmatprep.subr.mxu0 0.0
        %489 = vmatpush1.msra.mxu0 0.0
        %490 = vmatprep.subr.mxu0 0.0
        %491 = vmatpush1.msra.mxu0 0.0
        %492 = vmatprep.subr.mxu0 0.0
        %493 = vmatpush1.msra.mxu0 0.0
        %494 = vmatprep.subr.mxu0 0.0
        %495 = vmatpush1.msra.mxu0 0.0
        %496 = vmatprep.mubr.f32.mxu0 0.0
        %497 = vmatmul.mubr.f32.gmra.mrb[0].mxu0 %v414
        %v498 = vpop.f32.mrb[0].mxu0
        %v499 = vadd.f32 0.0, %v498
        %v500 = vpop.f32.mrb[0].mxu0
        %501 = vdwg.mxu0
        %v502 = vadd.f32 %v415, %v499
        %503 = vst [vmem:[#allocation2] sm:$0xff] %v502
        // Predicated region
        $region57: #{_ffn_call.1} parent=39 // pred_check
          %p504 = pneg %p311
        $region58: #{_ffn_call.1} parent=39 // pred_check_branch
          %506 = sbr.rel (%p504) target = $region60
        $region59: #{_ffn_call.1} parent=39 // pred_region
          %v507 = vld [vmem:[#allocation2] sm:$0xff]
          %v508 = vld [vmem:[%s4] sm:$0x1]
          %v510 = vlaneseq
          %v511 = vshrl.u32 %v510, 7
          %v512 = vsub.s32 0, %v511
          %v513 = vrot.slane %v508, %v512
          %v515 = vadd.f32 %v507, %v513
          %516 = vst [vmem:[%s306] sm:$0xff] %v515
        $region60: #{_ffn_call.1} parent=39 // pred_fallthru
          _
        %s517 = sand.u32 %s168, 1
        %s518 = scalar_lea.sflag [#allocation5], %s517
        %s519 = sand.u32 %s168, 1
        %s520 = smul.addr %s519, 8
        %s521 = scalar_lea.vmem [#allocation9], %s520
        // Predicated region
        $region61: #{_ffn_call.1} parent=39 // pred_check
          %p522 = pneg %p178
        $region62: #{_ffn_call.1} parent=39 // pred_check_branch
          %524 = sbr.rel (%p522) target = $region64
        $region63: #{_ffn_call.1} parent=39 // pred_region
          %s526 = ssub.s32 128, 128
          %527 = vsyncadd %s518, %s526
          %s528 = smul.addr %s27, 128
          %s529 = scalar_lea.hbm %s5, %s528
          %s531 = sshll.u32 %s521, 4
          %s532 = int_to_ptr.vmem [resolvable:$true] %s531
          %534 = dma.vmem_to_hbm [thread:$0]  %s532, 128, %s529, %s518
        $region64: #{_ffn_call.1} parent=39 // pred_fallthru
          _
      $region40: #{_ffn_call.1} parent=5 // pred_fallthru
        _
      %p535 = scmp.le.s32.totalorder 2, %s18
      // Predicated region
      $region65: #{_ffn_call.1} parent=5 // pred_check
        %p536 = pneg %p535
      $region66: #{_ffn_call.1} parent=5 // pred_check_branch
        %538 = sbr.rel (%p536) target = $region68
      $region67: #{_ffn_call.1} parent=5 // pred_region
        %s539 = ssub.s32 %s18, 2
        // Predicated region
        $region69: #{_ffn_call.1} parent=67 // pred_check
          %p540 = pneg %p184
        $region70: #{_ffn_call.1} parent=67 // pred_check_branch
          %542 = sbr.rel (%p540) target = $region72
        $region71: #{_ffn_call.1} parent=67 // pred_region
          %s543 = sand.u32 %s169, 1
          %s544 = scalar_lea.sflag [#allocation5], %s543
          %s545 = sand.u32 %s169, 1
          %s546 = smul.addr %s545, 8
          %s547 = scalar_lea.vmem [#allocation9], %s546
          %548 = dma.done %s544, 128
        $region72: #{_ffn_call.1} parent=67 // pred_fallthru
          _
      $region68: #{_ffn_call.1} parent=5 // pred_fallthru
        _
    $region6: #{_ffn_call.1} parent=1 // loop_footer
      %s22 = sadd.s32 1, %s18
    $region7: #{_ffn_call.1} parent=1 // loop_footer_branch
      %17 = sbr.rel target = $region3
    $region8: #{_ffn_call.1} parent=1 // loop_exit
      _
    %549 = vsyncpa [#allocation4], 1
    %s550 = scalar_lea.sflag [#allocation4], 1
    %551 = vsyncpa %s550, 1
    %552 = vsyncpa [#allocation7], 1
    %553 = vsyncpa [#allocation5], 1
    %s554 = scalar_lea.sflag [#allocation5], 1
    %555 = vsyncpa %s554, 1

</llo_original>
